<compile_context>
chip_gen: v7x
topology: tpu7x:2x2x1
jax: 0.10.0
libtpu: 0.0.40
codegen_flags: <defaults>
</compile_context>

<pallas_src>
import functools

import jax
import jax.numpy as jnp
from jax import lax
from jax.experimental import pallas as pl
from jax.experimental.pallas import tpu as pltpu

LANE = 128
SUBLANE = 8


def _pick_tile_cout(cout):
    """Cout tile: true width when < 128 (no padded writeback), MXU-native otherwise."""
    if cout < LANE:
        return cout                      # full-dim block; masked stores, minimal HBM bytes
    if cout % 256 == 0:
        return 256                       # v6e/v7x MXU is 2x256^2
    return LANE                          # 128 tiles (also the right choice on v5e)


def _pick_tile_m(m, k, tc, *, vmem_budget_bytes):
    """Largest sublane-aligned M tile (<= 2048) that fits the per-step VMEM budget."""
    k_lanes = pl.cdiv(k, LANE) * LANE
    c_lanes = pl.cdiv(tc, LANE) * LANE
    # double-buffered bf16 input rows + double-buffered bf16 output rows
    per_row = 2 * k_lanes * 2 + 2 * c_lanes * 2
    # weight block (double-buffered by the pipeline) + f32 bias block
    fixed = 2 * (pl.cdiv(k, 16) * 16) * c_lanes * 2 + 2 * SUBLANE * c_lanes * 4
    cap = max(SUBLANE, (vmem_budget_bytes - fixed) // per_row)
    tm = min(2048, cap, pl.cdiv(m, SUBLANE) * SUBLANE)
    return max(SUBLANE, (tm // SUBLANE) * SUBLANE)


def _matmul_bn_lrelu_kernel(x_ref, w_ref, b_ref, o_ref, *, neg_slope):
    """One (M-tile, Cout-tile) grid step: im2col matmul + BN bias + LeakyReLU.

    x_ref: (TM, K)   bf16 im2col slab tile          (VMEM)
    w_ref: (K, TC)   bf16 weights, BN scale folded  (VMEM)
    b_ref: (1, TC)   f32 folded BN bias             (VMEM)
    o_ref: (TM, TC)  bf16 output tile               (VMEM)
    """
    acc = jnp.dot(x_ref[...], w_ref[...], preferred_element_type=jnp.float32)
    y = acc + b_ref[...]
    y = jnp.maximum(y, neg_slope * y)        # LeakyReLU(0.1): one VPU max, no cmp+select
    o_ref[...] = y.astype(o_ref.dtype)       # bf16 writeback


def convolution_layer(x_nchw, weight, gamma, beta, running_mean, running_var,
                      *, stride=1, padding=0, eps=1e-5, neg_slope=0.1,
                      vmem_budget_bytes=24 * 1024 * 1024):
    """Forward pass of ConvolutionLayer: Conv2d(bias=False) -> BN(eval) -> LeakyReLU(0.1).

    x_nchw: (N, Cin, H, W), weight: (Cout, Cin, KH, KW). Returns (N, Cout, Ho, Wo).
    """
    N, Cin, H, W = x_nchw.shape
    Cout, Cin_w, KH, KW = weight.shape
    assert Cin_w == Cin, "groups > 1 not supported"  # TODO(synk): grouped conv
    Ho = (H + 2 * padding - KH) // stride + 1
    Wo = (W + 2 * padding - KW) // stride + 1
    K = KH * KW * Cin
    M = N * Ho * Wo

    # ---- input plumbing: ONE fused XLA producer.  bf16 cast happens with the
    # transpose (halves transpose bytes); spatial pad + KH*KW strided tap slices
    # give a lane-dense (M, K) im2col slab.  For small-Cin layers this is cheaper
    # than wasting 128-wide lanes on Cin inside the kernel.  (In a composed NHWC
    # bf16 network the transpose would disappear entirely.)
    x_nhwc = jnp.transpose(x_nchw.astype(jnp.bfloat16), (0, 2, 3, 1))
    xp = jnp.pad(x_nhwc, ((0, 0), (padding, padding), (padding, padding), (0, 0)))
    cols = []
    for kh in range(KH):
        for kw in range(KW):
            cols.append(xp[:, kh:kh + (Ho - 1) * stride + 1:stride,
                              kw:kw + (Wo - 1) * stride + 1:stride, :])   # (N,Ho,Wo,Cin)
    slab = jnp.concatenate(cols, axis=-1).reshape(M, K)                   # (M, K) bf16

    # ---- fold BN(eval) into the conv weights / bias.
    scale = gamma / jnp.sqrt(running_var + eps)                           # (Cout,)
    bias = beta - running_mean * scale                                    # (Cout,)
    w2 = jnp.transpose(weight, (2, 3, 1, 0)) * scale[None, None, None, :]  # (KH,KW,Cin,Cout)
    w2 = w2.reshape(K, Cout).astype(jnp.bfloat16)
    b2 = bias.reshape(1, Cout).astype(jnp.float32)

    # ---- tiling (VMEM-budgeted so it also fits v7x's 64 MiB / 32 MiB scoped VMEM).
    tc = _pick_tile_cout(Cout)
    tm = _pick_tile_m(M, K, tc, vmem_budget_bytes=vmem_budget_bytes)
    m_pad = pl.cdiv(M, tm) * tm
    c_pad = pl.cdiv(Cout, tc) * tc
    if m_pad != M:
        slab = jnp.pad(slab, ((0, m_pad - M), (0, 0)))
    if c_pad != Cout:
        w2 = jnp.pad(w2, ((0, 0), (0, c_pad - Cout)))
        b2 = jnp.pad(b2, ((0, 0), (0, c_pad - Cout)))

    kernel = functools.partial(_matmul_bn_lrelu_kernel, neg_slope=neg_slope)

    out = pl.pallas_call(
        kernel,
        out_shape=jax.ShapeDtypeStruct((m_pad, c_pad), jnp.bfloat16),
        grid_spec=pltpu.PrefetchScalarGridSpec(
            num_scalar_prefetch=0,
            grid=(m_pad // tm, c_pad // tc),
            in_specs=[
                pl.BlockSpec((tm, K), lambda i, j: (i, 0)),
                # NOTE: constant-per-i index maps mean the weight/bias blocks are
                # only DMA'd when j changes; for huge layers single-buffer them
                # (pipeline_mode=pl.Buffered(1)) to save v7x VMEM.
                pl.BlockSpec((K, tc), lambda i, j: (0, j)),
                pl.BlockSpec((1, tc), lambda i, j: (0, j)),
            ],
            out_specs=pl.BlockSpec((tm, tc), lambda i, j: (i, j)),
        ),
        compiler_params=pltpu.CompilerParams(
            dimension_semantics=("parallel", "parallel"),
            vmem_limit_bytes=32 * 1024 * 1024),
    )(slab, w2, b2)

    out = out[:M, :Cout].reshape(N, Ho, Wo, Cout)
    # Back to NCHW to match the PyTorch module; in a composed NHWC/bf16 network
    # this transpose + cast would be skipped.
    return jnp.transpose(out, (0, 3, 1, 2)).astype(x_nchw.dtype)


def _reference_module(x, weight, gamma, beta, mean, var,
                      *, stride, padding, eps=1e-5, neg_slope=0.1):
    """Exact f32 semantics of Conv2d -> BatchNorm2d(eval) -> LeakyReLU(0.1)."""
    y = lax.conv_general_dilated(
        x.astype(jnp.float32), weight.astype(jnp.float32),
        (stride, stride), ((padding, padding), (padding, padding)),
        dimension_numbers=("NCHW", "OIHW", "NCHW"))
    scale = gamma / jnp.sqrt(var + eps)
    bias = beta - mean * scale
    y = y * scale[None, :, None, None] + bias[None, :, None, None]
    return jnp.where(y >= 0, y, neg_slope * y)


def _reference_bf16(x, weight, gamma, beta, mean, var,
                    *, stride, padding, eps=1e-5, neg_slope=0.1):
    """Reference mirroring the kernel's bf16-input / f32-accumulate numerics."""
    scale = gamma / jnp.sqrt(var + eps)
    bias = beta - mean * scale
    w = (weight * scale[:, None, None, None]).astype(jnp.bfloat16)
    y = lax.conv_general_dilated(
        x.astype(jnp.bfloat16), w,
        (stride, stride), ((padding, padding), (padding, padding)),
        dimension_numbers=("NCHW", "OIHW", "NCHW"),
        preferred_element_type=jnp.float32)
    y = y + bias[None, :, None, None]
    return jnp.where(y >= 0, y, neg_slope * y)


if __name__ == "__main__":
    # ConvolutionLayer(in_channels=4, out_channels=8, kernel_size=3, stride=1, padding=1)
    N, Cin, H, W = 2, 4, 16, 16
    Cout, Ksz, stride, padding = 8, 3, 1, 1

    key = jax.random.PRNGKey(0)
    kx, kw, kg, kb, km, kv = jax.random.split(key, 6)

    x = jax.random.normal(kx, (N, Cin, H, W), dtype=jnp.float32)
    weight = jax.random.normal(kw, (Cout, Cin, Ksz, Ksz), dtype=jnp.float32) * 0.1
    gamma = 1.0 + 0.1 * jax.random.normal(kg, (Cout,), dtype=jnp.float32)
    beta = 0.1 * jax.random.normal(kb, (Cout,), dtype=jnp.float32)
    running_mean = 0.1 * jax.random.normal(km, (Cout,), dtype=jnp.float32)
    running_var = 1.0 + jnp.abs(jax.random.normal(kv, (Cout,), dtype=jnp.float32))

    fwd = jax.jit(lambda *a: convolution_layer(*a, stride=stride, padding=padding))
    out = jax.block_until_ready(fwd(x, weight, gamma, beta, running_mean, running_var))
    assert out.shape == (N, Cout, H, W), out.shape

    ref_bf16 = _reference_bf16(x, weight, gamma, beta, running_mean, running_var,
                               stride=stride, padding=padding)
    ref_f32 = _reference_module(x, weight, gamma, beta, running_mean, running_var,
                                stride=stride, padding=padding)
    err_bf16 = float(jnp.max(jnp.abs(out.astype(jnp.float32) - ref_bf16)))
    err_f32 = float(jnp.max(jnp.abs(out.astype(jnp.float32) - ref_f32)))
    # Output is stored in bf16 (per perf review), so allow bf16-rounding tolerance.
    assert err_bf16 < 5e-2, err_bf16
    assert err_f32 < 1e-1, err_f32

    print("KERNEL_OK")
</pallas_src>

<mosaic_0001>
module attributes {stable_mosaic.version = 11 : i64} {
  func.func @_matmul_bn_lrelu_kernel(%arg0: i32, %arg1: i32, %arg2: memref<512x36xbf16, #tpu.memory_space<vmem>>, %arg3: memref<36x8xbf16, #tpu.memory_space<vmem>>, %arg4: memref<1x8xf32, #tpu.memory_space<vmem>>, %arg5: memref<512x8xbf16, #tpu.memory_space<vmem>>) attributes {dimension_semantics = [#tpu.dimension_semantics<parallel>, #tpu.dimension_semantics<parallel>], iteration_bounds = array<i64: 1, 1>, scalar_prefetch = 0 : i64, scratch_operands = 0 : i64, tpu.core_type = #tpu.core_type<tc>, window_params = [{transform_indices = @transform_0, window_bounds = array<i64: 512, 36>}, {transform_indices = @transform_1, window_bounds = array<i64: 36, 8>}, {transform_indices = @transform_2, window_bounds = array<i64: 1, 8>}, {transform_indices = @transform_3, window_bounds = array<i64: 512, 8>}]} {
    %c0 = arith.constant 0 : index
    %c0_0 = arith.constant 0 : index
    %0 = vector.load %arg2[%c0, %c0_0] : memref<512x36xbf16, #tpu.memory_space<vmem>>, vector<512x36xbf16>
    %c0_1 = arith.constant 0 : index
    %c0_2 = arith.constant 0 : index
    %1 = vector.load %arg3[%c0_1, %c0_2] : memref<36x8xbf16, #tpu.memory_space<vmem>>, vector<36x8xbf16>
    %cst = arith.constant dense<0.000000e+00> : vector<512x8xf32>
    %2 = tpu.matmul %0, %1, %cst {dimension_numbers = #tpu.dot_dimension_numbers<[1], [0], [0], [1], [0, 0, 1, 1], [], []>} : vector<512x36xbf16>, vector<36x8xbf16>, vector<512x8xf32> -> vector<512x8xf32>
    %c0_3 = arith.constant 0 : index
    %c0_4 = arith.constant 0 : index
    %3 = vector.load %arg4[%c0_3, %c0_4] : memref<1x8xf32, #tpu.memory_space<vmem>>, vector<1x8xf32>
    %4 = vector.broadcast %3 : vector<1x8xf32> to vector<512x8xf32>
    %5 = arith.addf %2, %4 : vector<512x8xf32>
    %cst_5 = arith.constant 1.000000e-01 : f32
    %6 = vector.broadcast %cst_5 : f32 to vector<512x8xf32>
    %7 = arith.mulf %6, %5 : vector<512x8xf32>
    %8 = arith.maximumf %5, %7 : vector<512x8xf32>
    %9 = arith.truncf %8 : vector<512x8xf32> to vector<512x8xbf16>
    %c0_6 = arith.constant 0 : index
    %c0_7 = arith.constant 0 : index
    %10 = vector.load %arg5[%c0_6, %c0_7] : memref<512x8xbf16, #tpu.memory_space<vmem>>, vector<512x8xbf16>
    tpu.vector_store %arg5[%c0_6, %c0_7], %9 {strides = array<i32>} : memref<512x8xbf16, #tpu.memory_space<vmem>>, vector<512x8xbf16>,
    return
  }
  func.func @transform_0(%arg0: i32, %arg1: i32) -> (i32, i32) {
    %c0_i32 = arith.constant 0 : i32
    %c0_i32_0 = arith.constant 0 : i32
    return %arg0, %c0_i32 : i32, i32
  }
  func.func @transform_1(%arg0: i32, %arg1: i32) -> (i32, i32) {
    %c0_i32 = arith.constant 0 : i32
    %c0_i32_0 = arith.constant 0 : i32
    return %c0_i32, %arg1 : i32, i32
  }
  func.func @transform_2(%arg0: i32, %arg1: i32) -> (i32, i32) {
    %c0_i32 = arith.constant 0 : i32
    %c0_i32_0 = arith.constant 0 : i32
    return %c0_i32, %arg1 : i32, i32
  }
  func.func @transform_3(%arg0: i32, %arg1: i32) -> (i32, i32) {
    %c0_i32 = arith.constant 0 : i32
    return %arg0, %arg1 : i32, i32
  }
}

</mosaic_0001>

<llo_original>
// kernel: _lambda_.1
$region0: #{_lambda_.1}
  #allocation0 [shape = 'u32[]', space=smem, size = 0x4, offset = 0x4, fixed_abs, tag = 'smem constant byte address 0x4 - core index']
  #allocation1 [shape = 'u32[144,128]{1,0:T(1,128)}', space=vmem, size = 0x12000, scoped, tag = 'internal scratch']
  %s0 = inlined_call_operand.vmem [shape: bf16[512,36], index: 0, kind: input, shape index: {}]
  %s1 = inlined_call_operand.vmem [shape: bf16[36,8], index: 1, kind: input, shape index: {}]
  %s2 = inlined_call_operand.vmem [shape: f32[1,8], index: 2, kind: input, shape index: {}]
  %s3 = inlined_call_operand.vmem [shape: bf16[512,8], index: 3, kind: output, shape index: {}]
  %s4 = sld [smem:[#allocation0]]
  $region22: #{_lambda_.1} parent=0
    _
  %s6 = ssub.s32 1, %s4
  %s7 = scalar_select 0, %s6, %s4
  // Predicated region
  $region2: #{_lambda_.1} parent=0 // pred_check
    _
  $region3: #{_lambda_.1} parent=0 // pred_check_branch
    %9 = sbr.rel (0) target = $region5
  $region4: #{_lambda_.1} parent=0 // pred_region
    _
  $region5: #{_lambda_.1} parent=0 // pred_fallthru
    _
  // Predicated region
  $region6: #{_lambda_.1} parent=0 // pred_check
    _
  $region7: #{_lambda_.1} parent=0 // pred_check_branch
    %11 = sbr.rel (0) target = $region9
  $region8: #{_lambda_.1} parent=0 // pred_region
    _
  $region9: #{_lambda_.1} parent=0 // pred_fallthru
    _
  // Predicated region
  $region10: #{_lambda_.1} parent=0 // pred_check
    _
  $region11: #{_lambda_.1} parent=0 // pred_check_branch
    %13 = sbr.rel (0) target = $region13
  $region12: #{_lambda_.1} parent=0 // pred_region
    _
  $region13: #{_lambda_.1} parent=0 // pred_fallthru
    _
  %v15 = vld [vmem:[%s0] sm:$0xf]
  %v16 = vld [vmem:[%s0 + $0x4] sm:$0xf]
  %v17 = vld [vmem:[%s0 + $0x8] sm:$0xf]
  %v18 = vld [vmem:[%s0 + $0xc] sm:$0xf]
  %v19 = vld [vmem:[%s0 + $0x10] sm:$0xf]
  %v20 = vld [vmem:[%s0 + $0x14] sm:$0xf]
  %v21 = vld [vmem:[%s0 + $0x18] sm:$0xf]
  %v22 = vld [vmem:[%s0 + $0x1c] sm:$0xf]
  %v23 = vld [vmem:[%s0 + $0x20] sm:$0xf]
  %v24 = vld [vmem:[%s0 + $0x24] sm:$0xf]
  %v25 = vld [vmem:[%s0 + $0x28] sm:$0xf]
  %v26 = vld [vmem:[%s0 + $0x2c] sm:$0xf]
  %v27 = vld [vmem:[%s0 + $0x30] sm:$0xf]
  %v28 = vld [vmem:[%s0 + $0x34] sm:$0xf]
  %v29 = vld [vmem:[%s0 + $0x38] sm:$0xf]
  %v30 = vld [vmem:[%s0 + $0x3c] sm:$0xf]
  %v31 = vld [vmem:[%s0 + $0x40] sm:$0xf]
  %v32 = vld [vmem:[%s0 + $0x44] sm:$0xf]
  %v33 = vld [vmem:[%s0 + $0x48] sm:$0xf]
  %v34 = vld [vmem:[%s0 + $0x4c] sm:$0xf]
  %v35 = vld [vmem:[%s0 + $0x50] sm:$0xf]
  %v36 = vld [vmem:[%s0 + $0x54] sm:$0xf]
  %v37 = vld [vmem:[%s0 + $0x58] sm:$0xf]
  %v38 = vld [vmem:[%s0 + $0x5c] sm:$0xf]
  %v39 = vld [vmem:[%s0 + $0x60] sm:$0xf]
  %v40 = vld [vmem:[%s0 + $0x64] sm:$0xf]
  %v41 = vld [vmem:[%s0 + $0x68] sm:$0xf]
  %v42 = vld [vmem:[%s0 + $0x6c] sm:$0xf]
  %v43 = vld [vmem:[%s0 + $0x70] sm:$0xf]
  %v44 = vld [vmem:[%s0 + $0x74] sm:$0xf]
  %v45 = vld [vmem:[%s0 + $0x78] sm:$0xf]
  %v46 = vld [vmem:[%s0 + $0x7c] sm:$0xf]
  %v47 = vld [vmem:[%s0 + $0x80] sm:$0xf]
  %v48 = vld [vmem:[%s0 + $0x84] sm:$0xf]
  %v49 = vld [vmem:[%s0 + $0x88] sm:$0xf]
  %v50 = vld [vmem:[%s0 + $0x8c] sm:$0xf]
  %v51 = vld [vmem:[%s0 + $0x90] sm:$0xf]
  %v52 = vld [vmem:[%s0 + $0x94] sm:$0xf]
  %v53 = vld [vmem:[%s0 + $0x98] sm:$0xf]
  %v54 = vld [vmem:[%s0 + $0x9c] sm:$0xf]
  %v55 = vld [vmem:[%s0 + $0xa0] sm:$0xf]
  %v56 = vld [vmem:[%s0 + $0xa4] sm:$0xf]
  %v57 = vld [vmem:[%s0 + $0xa8] sm:$0xf]
  %v58 = vld [vmem:[%s0 + $0xac] sm:$0xf]
  %v59 = vld [vmem:[%s0 + $0xb0] sm:$0xf]
  %v60 = vld [vmem:[%s0 + $0xb4] sm:$0xf]
  %v61 = vld [vmem:[%s0 + $0xb8] sm:$0xf]
  %v62 = vld [vmem:[%s0 + $0xbc] sm:$0xf]
  %v63 = vld [vmem:[%s0 + $0xc0] sm:$0xf]
  %v64 = vld [vmem:[%s0 + $0xc4] sm:$0xf]
  %v65 = vld [vmem:[%s0 + $0xc8] sm:$0xf]
  %v66 = vld [vmem:[%s0 + $0xcc] sm:$0xf]
  %v67 = vld [vmem:[%s0 + $0xd0] sm:$0xf]
  %v68 = vld [vmem:[%s0 + $0xd4] sm:$0xf]
  %v69 = vld [vmem:[%s0 + $0xd8] sm:$0xf]
  %v70 = vld [vmem:[%s0 + $0xdc] sm:$0xf]
  %v71 = vld [vmem:[%s0 + $0xe0] sm:$0xf]
  %v72 = vld [vmem:[%s0 + $0xe4] sm:$0xf]
  %v73 = vld [vmem:[%s0 + $0xe8] sm:$0xf]
  %v74 = vld [vmem:[%s0 + $0xec] sm:$0xf]
  %v75 = vld [vmem:[%s0 + $0xf0] sm:$0xf]
  %v76 = vld [vmem:[%s0 + $0xf4] sm:$0xf]
  %v77 = vld [vmem:[%s0 + $0xf8] sm:$0xf]
  %v78 = vld [vmem:[%s0 + $0xfc] sm:$0xf]
  %v79 = vld [vmem:[%s1] sm:$0xf]
  %v80 = vld [vmem:[%s1 + $0x4] sm:$0xf]
  %v81 = vld [vmem:[%s1 + $0x8] sm:$0xf]
  %v82 = vld [vmem:[%s1 + $0xc] sm:$0xf]
  %v83 = vld [vmem:[%s1 + $0x10] sm:$0x3]
  %v84 = vld [vmem:[%s2] sm:$0x1]
  %v86 = vlaneseq
  %v87 = vshrl.u32 %v86, 7
  %v88 = vsub.s32 0, %v87
  %v89 = vrot.slane %v84, %v88
  %v155 = vunpack.c.l.b16 %v15
  %v156 = vunpack.c.l.b16 %v16
  %v157 = vunpack.c.l.b16 %v17
  %v158 = vunpack.c.l.b16 %v18
  %v159 = vunpack.c.l.b16 %v19
  %v160 = vunpack.c.l.b16 %v20
  %v161 = vunpack.c.l.b16 %v21
  %v162 = vunpack.c.l.b16 %v22
  %v163 = vunpack.c.l.b16 %v23
  %v164 = vunpack.c.l.b16 %v24
  %v165 = vunpack.c.l.b16 %v25
  %v166 = vunpack.c.l.b16 %v26
  %v167 = vunpack.c.l.b16 %v27
  %v168 = vunpack.c.l.b16 %v28
  %v169 = vunpack.c.l.b16 %v29
  %v170 = vunpack.c.l.b16 %v30
  %v171 = vunpack.c.l.b16 %v31
  %v172 = vunpack.c.l.b16 %v32
  %v173 = vunpack.c.l.b16 %v33
  %v174 = vunpack.c.l.b16 %v34
  %v175 = vunpack.c.l.b16 %v35
  %v176 = vunpack.c.l.b16 %v36
  %v177 = vunpack.c.l.b16 %v37
  %v178 = vunpack.c.l.b16 %v38
  %v179 = vunpack.c.l.b16 %v39
  %v180 = vunpack.c.l.b16 %v40
  %v181 = vunpack.c.l.b16 %v41
  %v182 = vunpack.c.l.b16 %v42
  %v183 = vunpack.c.l.b16 %v43
  %v184 = vunpack.c.l.b16 %v44
  %v185 = vunpack.c.l.b16 %v45
  %v186 = vunpack.c.l.b16 %v46
  %v187 = vunpack.c.l.b16 %v47
  %v188 = vunpack.c.l.b16 %v48
  %v189 = vunpack.c.l.b16 %v49
  %v190 = vunpack.c.l.b16 %v50
  %v191 = vunpack.c.l.b16 %v51
  %v192 = vunpack.c.l.b16 %v52
  %v193 = vunpack.c.l.b16 %v53
  %v194 = vunpack.c.l.b16 %v54
  %v195 = vunpack.c.l.b16 %v55
  %v196 = vunpack.c.l.b16 %v56
  %v197 = vunpack.c.l.b16 %v57
  %v198 = vunpack.c.l.b16 %v58
  %v199 = vunpack.c.l.b16 %v59
  %v200 = vunpack.c.l.b16 %v60
  %v201 = vunpack.c.l.b16 %v61
  %v202 = vunpack.c.l.b16 %v62
  %v203 = vunpack.c.l.b16 %v63
  %v204 = vunpack.c.l.b16 %v64
  %v205 = vunpack.c.l.b16 %v65
  %v206 = vunpack.c.l.b16 %v66
  %v207 = vunpack.c.l.b16 %v67
  %v208 = vunpack.c.l.b16 %v68
  %v209 = vunpack.c.l.b16 %v69
  %v210 = vunpack.c.l.b16 %v70
  %v211 = vunpack.c.l.b16 %v71
  %v212 = vunpack.c.l.b16 %v72
  %v213 = vunpack.c.l.b16 %v73
  %v214 = vunpack.c.l.b16 %v74
  %v215 = vunpack.c.l.b16 %v75
  %v216 = vunpack.c.l.b16 %v76
  %v217 = vunpack.c.l.b16 %v77
  %v218 = vunpack.c.l.b16 %v78
  %v219 = vpack.c.b16 %v156, %v155
  %v220 = vpack.c.b16 %v158, %v157
  %v221 = vpack.c.b16 %v160, %v159
  %v222 = vpack.c.b16 %v162, %v161
  %v223 = vpack.c.b16 %v164, %v163
  %v224 = vpack.c.b16 %v166, %v165
  %v225 = vpack.c.b16 %v168, %v167
  %v226 = vpack.c.b16 %v170, %v169
  %v227 = vpack.c.b16 %v172, %v171
  %v228 = vpack.c.b16 %v174, %v173
  %v229 = vpack.c.b16 %v176, %v175
  %v230 = vpack.c.b16 %v178, %v177
  %v231 = vpack.c.b16 %v180, %v179
  %v232 = vpack.c.b16 %v182, %v181
  %v233 = vpack.c.b16 %v184, %v183
  %v234 = vpack.c.b16 %v186, %v185
  %v235 = vpack.c.b16 %v188, %v187
  %v236 = vpack.c.b16 %v190, %v189
  %v237 = vpack.c.b16 %v192, %v191
  %v238 = vpack.c.b16 %v194, %v193
  %v239 = vpack.c.b16 %v196, %v195
  %v240 = vpack.c.b16 %v198, %v197
  %v241 = vpack.c.b16 %v200, %v199
  %v242 = vpack.c.b16 %v202, %v201
  %v243 = vpack.c.b16 %v204, %v203
  %v244 = vpack.c.b16 %v206, %v205
  %v245 = vpack.c.b16 %v208, %v207
  %v246 = vpack.c.b16 %v210, %v209
  %v247 = vpack.c.b16 %v212, %v211
  %v248 = vpack.c.b16 %v214, %v213
  %v249 = vpack.c.b16 %v216, %v215
  %v250 = vpack.c.b16 %v218, %v217
  %v256 = vunpack.c.l.b16 %v79
  %v257 = vunpack.c.l.b16 %v80
  %v258 = vunpack.c.l.b16 %v81
  %v259 = vunpack.c.l.b16 %v82
  %v260 = vunpack.c.l.b16 %v83
  %v261 = vpack.c.b16 %v257, %v256
  %v262 = vpack.c.b16 %v259, %v258
  %v263 = vpack.c.b16 %v260, %v260
  %vm266 = vcmask 293888
  %v268 = vsel %vm266, %v219, 0
  %v271 = vsel %vm266, %v220, 0
  %v274 = vsel %vm266, %v221, 0
  %v277 = vsel %vm266, %v222, 0
  %v280 = vsel %vm266, %v223, 0
  %v283 = vsel %vm266, %v224, 0
  %v286 = vsel %vm266, %v225, 0
  %v289 = vsel %vm266, %v226, 0
  %v292 = vsel %vm266, %v227, 0
  %v295 = vsel %vm266, %v228, 0
  %v298 = vsel %vm266, %v229, 0
  %v301 = vsel %vm266, %v230, 0
  %v304 = vsel %vm266, %v231, 0
  %v307 = vsel %vm266, %v232, 0
  %v310 = vsel %vm266, %v233, 0
  %v313 = vsel %vm266, %v234, 0
  %v316 = vsel %vm266, %v235, 0
  %v319 = vsel %vm266, %v236, 0
  %v322 = vsel %vm266, %v237, 0
  %v325 = vsel %vm266, %v238, 0
  %v328 = vsel %vm266, %v239, 0
  %v331 = vsel %vm266, %v240, 0
  %v334 = vsel %vm266, %v241, 0
  %v337 = vsel %vm266, %v242, 0
  %v340 = vsel %vm266, %v243, 0
  %v343 = vsel %vm266, %v244, 0
  %v346 = vsel %vm266, %v245, 0
  %v349 = vsel %vm266, %v246, 0
  %v352 = vsel %vm266, %v247, 0
  %v355 = vsel %vm266, %v248, 0
  %v358 = vsel %vm266, %v249, 0
  %v361 = vsel %vm266, %v250, 0
  %vm363 = vcmask 1041408
  %v365 = vsel %vm363, %v263, 0
  %367 = vmatprep.subr.bf16.mxu0 0
  %368 = vmatpush1.bf16.msra.mxu0 %v261
  %369 = vmatprep.subr.bf16.mxu0 0
  %370 = vmatpush1.bf16.msra.mxu0 %v262
  %371 = vmatprep.subr.bf16.mxu0 0
  %372 = vmatpush1.bf16.msra.mxu0 %v365
  %373 = vmatprep.subr.bf16.mxu0 0
  %374 = vmatpush1.bf16.msra.mxu0 0
  %375 = vmatprep.subr.bf16.mxu0 0
  %376 = vmatpush1.bf16.msra.mxu0 0
  %377 = vmatprep.subr.bf16.mxu0 0
  %378 = vmatpush1.bf16.msra.mxu0 0
  %379 = vmatprep.subr.bf16.mxu0 0
  %380 = vmatpush1.bf16.msra.mxu0 0
  %381 = vmatprep.subr.bf16.mxu0 0
  %382 = vmatpush1.bf16.msra.mxu0 0
  %383 = vmatprep.subr.bf16.mxu0 0
  %384 = vmatpush1.bf16.msra.mxu0 0
  %385 = vmatprep.subr.bf16.mxu0 0
  %386 = vmatpush1.bf16.msra.mxu0 0
  %387 = vmatprep.subr.bf16.mxu0 0
  %388 = vmatpush1.bf16.msra.mxu0 0
  %389 = vmatprep.subr.bf16.mxu0 0
  %390 = vmatpush1.bf16.msra.mxu0 0
  %391 = vmatprep.subr.bf16.mxu0 0
  %392 = vmatpush1.bf16.msra.mxu0 0
  %393 = vmatprep.subr.bf16.mxu0 0
  %394 = vmatpush1.bf16.msra.mxu0 0
  %395 = vmatprep.subr.bf16.mxu0 0
  %396 = vmatpush1.bf16.msra.mxu0 0
  %397 = vmatprep.subr.bf16.mxu0 0
  %398 = vmatpush1.bf16.msra.mxu0 0
  %399 = vmatprep.mubr.bf16.mxu0 0
  %400 = vmatmul.mubr.bf16.gmra.mrb[0].mxu0 %v268
  %v401 = vpop.f32.mrb[0].mxu0
  %v402 = vadd.f32 %v89, %v401
  %v403 = vpop.f32.mrb[0].mxu0
  %v404 = vpop.f32.mrb[0].mxu0
  %v405 = vadd.f32 %v89, %v404
  %v406 = vpop.f32.mrb[0].mxu0
  %407 = vmatprep.mubr.bf16.mxu0 0
  %408 = vmatmul.mubr.bf16.gmra.mrb[0].mxu0 %v271
  %v409 = vpop.f32.mrb[0].mxu0
  %v410 = vadd.f32 %v89, %v409
  %v411 = vpop.f32.mrb[0].mxu0
  %v412 = vpop.f32.mrb[0].mxu0
  %v413 = vadd.f32 %v89, %v412
  %v414 = vpop.f32.mrb[0].mxu0
  %415 = vmatprep.mubr.bf16.mxu0 0
  %416 = vmatmul.mubr.bf16.gmra.mrb[0].mxu0 %v274
  %v417 = vpop.f32.mrb[0].mxu0
  %v418 = vadd.f32 %v89, %v417
  %v419 = vpop.f32.mrb[0].mxu0
  %v420 = vpop.f32.mrb[0].mxu0
  %v421 = vadd.f32 %v89, %v420
  %v422 = vpop.f32.mrb[0].mxu0
  %423 = vmatprep.mubr.bf16.mxu0 0
  %424 = vmatmul.mubr.bf16.gmra.mrb[0].mxu0 %v277
  %v425 = vpop.f32.mrb[0].mxu0
  %v426 = vadd.f32 %v89, %v425
  %v427 = vpop.f32.mrb[0].mxu0
  %v428 = vpop.f32.mrb[0].mxu0
  %v429 = vadd.f32 %v89, %v428
  %v430 = vpop.f32.mrb[0].mxu0
  %431 = vmatprep.mubr.bf16.mxu0 0
  %432 = vmatmul.mubr.bf16.gmra.mrb[0].mxu0 %v280
  %v433 = vpop.f32.mrb[0].mxu0
  %v434 = vadd.f32 %v89, %v433
  %v435 = vpop.f32.mrb[0].mxu0
  %v436 = vpop.f32.mrb[0].mxu0
  %v437 = vadd.f32 %v89, %v436
  %v438 = vpop.f32.mrb[0].mxu0
  %439 = vmatprep.mubr.bf16.mxu0 0
  %440 = vmatmul.mubr.bf16.gmra.mrb[0].mxu0 %v283
  %v441 = vpop.f32.mrb[0].mxu0
  %v442 = vadd.f32 %v89, %v441
  %v443 = vpop.f32.mrb[0].mxu0
  %v444 = vpop.f32.mrb[0].mxu0
  %v445 = vadd.f32 %v89, %v444
  %v446 = vpop.f32.mrb[0].mxu0
  %447 = vmatprep.mubr.bf16.mxu0 0
  %448 = vmatmul.mubr.bf16.gmra.mrb[0].mxu0 %v286
  %v449 = vpop.f32.mrb[0].mxu0
  %v450 = vadd.f32 %v89, %v449
  %v451 = vpop.f32.mrb[0].mxu0
  %v452 = vpop.f32.mrb[0].mxu0
  %v453 = vadd.f32 %v89, %v452
  %v454 = vpop.f32.mrb[0].mxu0
  %455 = vmatprep.mubr.bf16.mxu0 0
  %456 = vmatmul.mubr.bf16.gmra.mrb[0].mxu0 %v289
  %v457 = vpop.f32.mrb[0].mxu0
  %v458 = vadd.f32 %v89, %v457
  %v459 = vpop.f32.mrb[0].mxu0
  %v460 = vpop.f32.mrb[0].mxu0
  %v461 = vadd.f32 %v89, %v460
  %v462 = vpop.f32.mrb[0].mxu0
  %463 = vmatprep.mubr.bf16.mxu0 0
  %464 = vmatmul.mubr.bf16.gmra.mrb[0].mxu0 %v292
  %v465 = vpop.f32.mrb[0].mxu0
  %v466 = vadd.f32 %v89, %v465
  %v467 = vpop.f32.mrb[0].mxu0
  %v468 = vpop.f32.mrb[0].mxu0
  %v469 = vadd.f32 %v89, %v468
  %v470 = vpop.f32.mrb[0].mxu0
  %471 = vmatprep.mubr.bf16.mxu0 0
  %472 = vmatmul.mubr.bf16.gmra.mrb[0].mxu0 %v295
  %v473 = vpop.f32.mrb[0].mxu0
  %v474 = vadd.f32 %v89, %v473
  %v475 = vpop.f32.mrb[0].mxu0
  %v476 = vpop.f32.mrb[0].mxu0
  %v477 = vadd.f32 %v89, %v476
  %v478 = vpop.f32.mrb[0].mxu0
  %479 = vmatprep.mubr.bf16.mxu0 0
  %480 = vmatmul.mubr.bf16.gmra.mrb[0].mxu0 %v298
  %v481 = vpop.f32.mrb[0].mxu0
  %v482 = vadd.f32 %v89, %v481
  %v483 = vpop.f32.mrb[0].mxu0
  %v484 = vpop.f32.mrb[0].mxu0
  %v485 = vadd.f32 %v89, %v484
  %v486 = vpop.f32.mrb[0].mxu0
  %487 = vmatprep.mubr.bf16.mxu0 0
  %488 = vmatmul.mubr.bf16.gmra.mrb[0].mxu0 %v301
  %v489 = vpop.f32.mrb[0].mxu0
  %v490 = vadd.f32 %v89, %v489
  %v491 = vpop.f32.mrb[0].mxu0
  %v492 = vpop.f32.mrb[0].mxu0
  %v493 = vadd.f32 %v89, %v492
  %v494 = vpop.f32.mrb[0].mxu0
  %495 = vmatprep.mubr.bf16.mxu0 0
  %496 = vmatmul.mubr.bf16.gmra.mrb[0].mxu0 %v304
  %v497 = vpop.f32.mrb[0].mxu0
  %v498 = vadd.f32 %v89, %v497
  %v499 = vpop.f32.mrb[0].mxu0
  %v500 = vpop.f32.mrb[0].mxu0
  %v501 = vadd.f32 %v89, %v500
  %v502 = vpop.f32.mrb[0].mxu0
  %503 = vmatprep.mubr.bf16.mxu0 0
  %504 = vmatmul.mubr.bf16.gmra.mrb[0].mxu0 %v307
  %v505 = vpop.f32.mrb[0].mxu0
  %v506 = vadd.f32 %v89, %v505
  %v507 = vpop.f32.mrb[0].mxu0
  %v508 = vpop.f32.mrb[0].mxu0
  %v509 = vadd.f32 %v89, %v508
  %v510 = vpop.f32.mrb[0].mxu0
  %511 = vmatprep.mubr.bf16.mxu0 0
  %512 = vmatmul.mubr.bf16.gmra.mrb[0].mxu0 %v310
  %v513 = vpop.f32.mrb[0].mxu0
  %v514 = vadd.f32 %v89, %v513
  %v515 = vpop.f32.mrb[0].mxu0
  %v516 = vpop.f32.mrb[0].mxu0
  %v517 = vadd.f32 %v89, %v516
  %v518 = vpop.f32.mrb[0].mxu0
  %519 = vmatprep.mubr.bf16.mxu0 0
  %520 = vmatmul.mubr.bf16.gmra.mrb[0].mxu0 %v313
  %v521 = vpop.f32.mrb[0].mxu0
  %v522 = vadd.f32 %v89, %v521
  %v523 = vpop.f32.mrb[0].mxu0
  %v524 = vpop.f32.mrb[0].mxu0
  %v525 = vadd.f32 %v89, %v524
  %v526 = vpop.f32.mrb[0].mxu0
  %527 = vmatprep.mubr.bf16.mxu0 0
  %528 = vmatmul.mubr.bf16.gmra.mrb[0].mxu0 %v316
  %v529 = vpop.f32.mrb[0].mxu0
  %v530 = vadd.f32 %v89, %v529
  %v531 = vpop.f32.mrb[0].mxu0
  %v532 = vpop.f32.mrb[0].mxu0
  %v533 = vadd.f32 %v89, %v532
  %v534 = vpop.f32.mrb[0].mxu0
  %535 = vmatprep.mubr.bf16.mxu0 0
  %536 = vmatmul.mubr.bf16.gmra.mrb[0].mxu0 %v319
  %v537 = vpop.f32.mrb[0].mxu0
  %v538 = vadd.f32 %v89, %v537
  %v539 = vpop.f32.mrb[0].mxu0
  %v540 = vpop.f32.mrb[0].mxu0
  %v541 = vadd.f32 %v89, %v540
  %v542 = vpop.f32.mrb[0].mxu0
  %543 = vmatprep.mubr.bf16.mxu0 0
  %544 = vmatmul.mubr.bf16.gmra.mrb[0].mxu0 %v322
  %v545 = vpop.f32.mrb[0].mxu0
  %v546 = vadd.f32 %v89, %v545
  %v547 = vpop.f32.mrb[0].mxu0
  %v548 = vpop.f32.mrb[0].mxu0
  %v549 = vadd.f32 %v89, %v548
  %v550 = vpop.f32.mrb[0].mxu0
  %551 = vmatprep.mubr.bf16.mxu0 0
  %552 = vmatmul.mubr.bf16.gmra.mrb[0].mxu0 %v325
  %v553 = vpop.f32.mrb[0].mxu0
  %v554 = vadd.f32 %v89, %v553
  %v555 = vpop.f32.mrb[0].mxu0
  %v556 = vpop.f32.mrb[0].mxu0
  %v557 = vadd.f32 %v89, %v556
  %v558 = vpop.f32.mrb[0].mxu0
  %559 = vmatprep.mubr.bf16.mxu0 0
  %560 = vmatmul.mubr.bf16.gmra.mrb[0].mxu0 %v328
  %v561 = vpop.f32.mrb[0].mxu0
  %v562 = vadd.f32 %v89, %v561
  %v563 = vpop.f32.mrb[0].mxu0
  %v564 = vpop.f32.mrb[0].mxu0
  %v565 = vadd.f32 %v89, %v564
  %v566 = vpop.f32.mrb[0].mxu0
  %567 = vmatprep.mubr.bf16.mxu0 0
  %568 = vmatmul.mubr.bf16.gmra.mrb[0].mxu0 %v331
  %v569 = vpop.f32.mrb[0].mxu0
  %v570 = vadd.f32 %v89, %v569
  %v571 = vpop.f32.mrb[0].mxu0
  %v572 = vpop.f32.mrb[0].mxu0
  %v573 = vadd.f32 %v89, %v572
  %v574 = vpop.f32.mrb[0].mxu0
  %575 = vmatprep.mubr.bf16.mxu0 0
  %576 = vmatmul.mubr.bf16.gmra.mrb[0].mxu0 %v334
  %v577 = vpop.f32.mrb[0].mxu0
  %v578 = vadd.f32 %v89, %v577
  %v579 = vpop.f32.mrb[0].mxu0
  %v580 = vpop.f32.mrb[0].mxu0
  %v581 = vadd.f32 %v89, %v580
  %v582 = vpop.f32.mrb[0].mxu0
  %583 = vmatprep.mubr.bf16.mxu0 0
  %584 = vmatmul.mubr.bf16.gmra.mrb[0].mxu0 %v337
  %v585 = vpop.f32.mrb[0].mxu0
  %v586 = vadd.f32 %v89, %v585
  %v587 = vpop.f32.mrb[0].mxu0
  %v588 = vpop.f32.mrb[0].mxu0
  %v589 = vadd.f32 %v89, %v588
  %v590 = vpop.f32.mrb[0].mxu0
  %591 = vmatprep.mubr.bf16.mxu0 0
  %592 = vmatmul.mubr.bf16.gmra.mrb[0].mxu0 %v340
  %v593 = vpop.f32.mrb[0].mxu0
  %v594 = vadd.f32 %v89, %v593
  %v595 = vpop.f32.mrb[0].mxu0
  %v596 = vpop.f32.mrb[0].mxu0
  %v597 = vadd.f32 %v89, %v596
  %v598 = vpop.f32.mrb[0].mxu0
  %599 = vmatprep.mubr.bf16.mxu0 0
  %600 = vmatmul.mubr.bf16.gmra.mrb[0].mxu0 %v343
  %v601 = vpop.f32.mrb[0].mxu0
  %v602 = vadd.f32 %v89, %v601
  %v603 = vpop.f32.mrb[0].mxu0
  %v604 = vpop.f32.mrb[0].mxu0
  %v605 = vadd.f32 %v89, %v604
  %v606 = vpop.f32.mrb[0].mxu0
  %607 = vmatprep.mubr.bf16.mxu0 0
  %608 = vmatmul.mubr.bf16.gmra.mrb[0].mxu0 %v346
  %v609 = vpop.f32.mrb[0].mxu0
  %v610 = vadd.f32 %v89, %v609
  %v611 = vpop.f32.mrb[0].mxu0
  %v612 = vpop.f32.mrb[0].mxu0
  %v613 = vadd.f32 %v89, %v612
  %v614 = vpop.f32.mrb[0].mxu0
  %615 = vmatprep.mubr.bf16.mxu0 0
  %616 = vmatmul.mubr.bf16.gmra.mrb[0].mxu0 %v349
  %v617 = vpop.f32.mrb[0].mxu0
  %v618 = vadd.f32 %v89, %v617
  %v619 = vpop.f32.mrb[0].mxu0
  %v620 = vpop.f32.mrb[0].mxu0
  %v621 = vadd.f32 %v89, %v620
  %v622 = vpop.f32.mrb[0].mxu0
  %623 = vmatprep.mubr.bf16.mxu0 0
  %624 = vmatmul.mubr.bf16.gmra.mrb[0].mxu0 %v352
  %v625 = vpop.f32.mrb[0].mxu0
  %v626 = vadd.f32 %v89, %v625
  %v627 = vpop.f32.mrb[0].mxu0
  %v628 = vpop.f32.mrb[0].mxu0
  %v629 = vadd.f32 %v89, %v628
  %v630 = vpop.f32.mrb[0].mxu0
  %631 = vmatprep.mubr.bf16.mxu0 0
  %632 = vmatmul.mubr.bf16.gmra.mrb[0].mxu0 %v355
  %v633 = vpop.f32.mrb[0].mxu0
  %v634 = vadd.f32 %v89, %v633
  %v635 = vpop.f32.mrb[0].mxu0
  %v636 = vpop.f32.mrb[0].mxu0
  %v637 = vadd.f32 %v89, %v636
  %v638 = vpop.f32.mrb[0].mxu0
  %639 = vmatprep.mubr.bf16.mxu0 0
  %640 = vmatmul.mubr.bf16.gmra.mrb[0].mxu0 %v358
  %v641 = vpop.f32.mrb[0].mxu0
  %v642 = vadd.f32 %v89, %v641
  %v643 = vpop.f32.mrb[0].mxu0
  %v644 = vpop.f32.mrb[0].mxu0
  %v645 = vadd.f32 %v89, %v644
  %v646 = vpop.f32.mrb[0].mxu0
  %647 = vmatprep.mubr.bf16.mxu0 0
  %648 = vmatmul.mubr.bf16.gmra.mrb[0].mxu0 %v361
  %v649 = vpop.f32.mrb[0].mxu0
  %v650 = vadd.f32 %v89, %v649
  %v651 = vpop.f32.mrb[0].mxu0
  %v652 = vpop.f32.mrb[0].mxu0
  %v653 = vadd.f32 %v89, %v652
  %v654 = vpop.f32.mrb[0].mxu0
  %655 = vdwg.mxu0
  %v656 = vmul.f32 %v402, 0.1
  %v657 = vmul.f32 %v405, 0.1
  %v658 = vmul.f32 %v410, 0.1
  %v659 = vmul.f32 %v413, 0.1
  %v660 = vmul.f32 %v418, 0.1
  %v661 = vmul.f32 %v421, 0.1
  %v662 = vmul.f32 %v426, 0.1
  %v663 = vmul.f32 %v429, 0.1
  %v664 = vmul.f32 %v434, 0.1
  %v665 = vmul.f32 %v437, 0.1
  %v666 = vmul.f32 %v442, 0.1
  %v667 = vmul.f32 %v445, 0.1
  %v668 = vmul.f32 %v450, 0.1
  %v669 = vmul.f32 %v453, 0.1
  %v670 = vmul.f32 %v458, 0.1
  %v671 = vmul.f32 %v461, 0.1
  %v672 = vmul.f32 %v466, 0.1
  %v673 = vmul.f32 %v469, 0.1
  %v674 = vmul.f32 %v474, 0.1
  %v675 = vmul.f32 %v477, 0.1
  %v676 = vmul.f32 %v482, 0.1
  %v677 = vmul.f32 %v485, 0.1
  %v678 = vmul.f32 %v490, 0.1
  %v679 = vmul.f32 %v493, 0.1
  %v680 = vmul.f32 %v498, 0.1
  %v681 = vmul.f32 %v501, 0.1
  %v682 = vmul.f32 %v506, 0.1
  %v683 = vmul.f32 %v509, 0.1
  %v684 = vmul.f32 %v514, 0.1
  %v685 = vmul.f32 %v517, 0.1
  %v686 = vmul.f32 %v522, 0.1
  %v687 = vmul.f32 %v525, 0.1
  %v688 = vmul.f32 %v530, 0.1
  %v689 = vmul.f32 %v533, 0.1
  %v690 = vmul.f32 %v538, 0.1
  %v691 = vmul.f32 %v541, 0.1
  %v692 = vmul.f32 %v546, 0.1
  %v693 = vmul.f32 %v549, 0.1
  %v694 = vmul.f32 %v554, 0.1
  %v695 = vmul.f32 %v557, 0.1
  %v696 = vmul.f32 %v562, 0.1
  %v697 = vmul.f32 %v565, 0.1
  %v698 = vmul.f32 %v570, 0.1
  %v699 = vmul.f32 %v573, 0.1
  %v700 = vmul.f32 %v578, 0.1
  %v701 = vmul.f32 %v581, 0.1
  %v702 = vmul.f32 %v586, 0.1
  %v703 = vmul.f32 %v589, 0.1
  %v704 = vmul.f32 %v594, 0.1
  %v705 = vmul.f32 %v597, 0.1
  %v706 = vmul.f32 %v602, 0.1
  %v707 = vmul.f32 %v605, 0.1
  %v708 = vmul.f32 %v610, 0.1
  %v709 = vmul.f32 %v613, 0.1
  %v710 = vmul.f32 %v618, 0.1
  %v711 = vmul.f32 %v621, 0.1
  %v712 = vmul.f32 %v626, 0.1
  %v713 = vmul.f32 %v629, 0.1
  %v714 = vmul.f32 %v634, 0.1
  %v715 = vmul.f32 %v637, 0.1
  %v716 = vmul.f32 %v642, 0.1
  %v717 = vmul.f32 %v645, 0.1
  %v718 = vmul.f32 %v650, 0.1
  %v719 = vmul.f32 %v653, 0.1
  %v720 = vmax.f32 %v402, %v656
  %v721 = vmax.f32 %v405, %v657
  %v722 = vmax.f32 %v410, %v658
  %v723 = vmax.f32 %v413, %v659
  %v724 = vmax.f32 %v418, %v660
  %v725 = vmax.f32 %v421, %v661
  %v726 = vmax.f32 %v426, %v662
  %v727 = vmax.f32 %v429, %v663
  %v728 = vmax.f32 %v434, %v664
  %v729 = vmax.f32 %v437, %v665
  %v730 = vmax.f32 %v442, %v666
  %v731 = vmax.f32 %v445, %v667
  %v732 = vmax.f32 %v450, %v668
  %v733 = vmax.f32 %v453, %v669
  %v734 = vmax.f32 %v458, %v670
  %v735 = vmax.f32 %v461, %v671
  %v736 = vmax.f32 %v466, %v672
  %v737 = vmax.f32 %v469, %v673
  %v738 = vmax.f32 %v474, %v674
  %v739 = vmax.f32 %v477, %v675
  %v740 = vmax.f32 %v482, %v676
  %v741 = vmax.f32 %v485, %v677
  %v742 = vmax.f32 %v490, %v678
  %v743 = vmax.f32 %v493, %v679
  %v744 = vmax.f32 %v498, %v680
  %v745 = vmax.f32 %v501, %v681
  %v746 = vmax.f32 %v506, %v682
  %v747 = vmax.f32 %v509, %v683
  %v748 = vmax.f32 %v514, %v684
  %v749 = vmax.f32 %v517, %v685
  %v750 = vmax.f32 %v522, %v686
  %v751 = vmax.f32 %v525, %v687
  %v752 = vmax.f32 %v530, %v688
  %v753 = vmax.f32 %v533, %v689
  %v754 = vmax.f32 %v538, %v690
  %v755 = vmax.f32 %v541, %v691
  %v756 = vmax.f32 %v546, %v692
  %v757 = vmax.f32 %v549, %v693
  %v758 = vmax.f32 %v554, %v694
  %v759 = vmax.f32 %v557, %v695
  %v760 = vmax.f32 %v562, %v696
  %v761 = vmax.f32 %v565, %v697
  %v762 = vmax.f32 %v570, %v698
  %v763 = vmax.f32 %v573, %v699
  %v764 = vmax.f32 %v578, %v700
  %v765 = vmax.f32 %v581, %v701
  %v766 = vmax.f32 %v586, %v702
  %v767 = vmax.f32 %v589, %v703
  %v768 = vmax.f32 %v594, %v704
  %v769 = vmax.f32 %v597, %v705
  %v770 = vmax.f32 %v602, %v706
  %v771 = vmax.f32 %v605, %v707
  %v772 = vmax.f32 %v610, %v708
  %v773 = vmax.f32 %v613, %v709
  %v774 = vmax.f32 %v618, %v710
  %v775 = vmax.f32 %v621, %v711
  %v776 = vmax.f32 %v626, %v712
  %v777 = vmax.f32 %v629, %v713
  %v778 = vmax.f32 %v634, %v714
  %v779 = vmax.f32 %v637, %v715
  %v780 = vmax.f32 %v642, %v716
  %v781 = vmax.f32 %v645, %v717
  %v782 = vmax.f32 %v650, %v718
  %v783 = vmax.f32 %v653, %v719
  %v784 = vpack.c.bf16 %v721, %v720
  %v785 = vpack.c.bf16 %v723, %v722
  %v786 = vpack.c.bf16 %v725, %v724
  %v787 = vpack.c.bf16 %v727, %v726
  %v788 = vpack.c.bf16 %v729, %v728
  %v789 = vpack.c.bf16 %v731, %v730
  %v790 = vpack.c.bf16 %v733, %v732
  %v791 = vpack.c.bf16 %v735, %v734
  %v792 = vpack.c.bf16 %v737, %v736
  %v793 = vpack.c.bf16 %v739, %v738
  %v794 = vpack.c.bf16 %v741, %v740
  %v795 = vpack.c.bf16 %v743, %v742
  %v796 = vpack.c.bf16 %v745, %v744
  %v797 = vpack.c.bf16 %v747, %v746
  %v798 = vpack.c.bf16 %v749, %v748
  %v799 = vpack.c.bf16 %v751, %v750
  %v800 = vpack.c.bf16 %v753, %v752
  %v801 = vpack.c.bf16 %v755, %v754
  %v802 = vpack.c.bf16 %v757, %v756
  %v803 = vpack.c.bf16 %v759, %v758
  %v804 = vpack.c.bf16 %v761, %v760
  %v805 = vpack.c.bf16 %v763, %v762
  %v806 = vpack.c.bf16 %v765, %v764
  %v807 = vpack.c.bf16 %v767, %v766
  %v808 = vpack.c.bf16 %v769, %v768
  %v809 = vpack.c.bf16 %v771, %v770
  %v810 = vpack.c.bf16 %v773, %v772
  %v811 = vpack.c.bf16 %v775, %v774
  %v812 = vpack.c.bf16 %v777, %v776
  %v813 = vpack.c.bf16 %v779, %v778
  %v814 = vpack.c.bf16 %v781, %v780
  %v815 = vpack.c.bf16 %v783, %v782
  %v848 = vunpack.c.l.b16 %v784
  %v849 = vunpack.c.h.b16 %v784
  %v850 = vunpack.c.l.b16 %v785
  %v851 = vunpack.c.h.b16 %v785
  %v852 = vunpack.c.l.b16 %v786
  %v853 = vunpack.c.h.b16 %v786
  %v854 = vunpack.c.l.b16 %v787
  %v855 = vunpack.c.h.b16 %v787
  %v856 = vunpack.c.l.b16 %v788
  %v857 = vunpack.c.h.b16 %v788
  %v858 = vunpack.c.l.b16 %v789
  %v859 = vunpack.c.h.b16 %v789
  %v860 = vunpack.c.l.b16 %v790
  %v861 = vunpack.c.h.b16 %v790
  %v862 = vunpack.c.l.b16 %v791
  %v863 = vunpack.c.h.b16 %v791
  %v864 = vunpack.c.l.b16 %v792
  %v865 = vunpack.c.h.b16 %v792
  %v866 = vunpack.c.l.b16 %v793
  %v867 = vunpack.c.h.b16 %v793
  %v868 = vunpack.c.l.b16 %v794
  %v869 = vunpack.c.h.b16 %v794
  %v870 = vunpack.c.l.b16 %v795
  %v871 = vunpack.c.h.b16 %v795
  %v872 = vunpack.c.l.b16 %v796
  %v873 = vunpack.c.h.b16 %v796
  %v874 = vunpack.c.l.b16 %v797
  %v875 = vunpack.c.h.b16 %v797
  %v876 = vunpack.c.l.b16 %v798
  %v877 = vunpack.c.h.b16 %v798
  %v878 = vunpack.c.l.b16 %v799
  %v879 = vunpack.c.h.b16 %v799
  %v880 = vunpack.c.l.b16 %v800
  %v881 = vunpack.c.h.b16 %v800
  %v882 = vunpack.c.l.b16 %v801
  %v883 = vunpack.c.h.b16 %v801
  %v884 = vunpack.c.l.b16 %v802
  %v885 = vunpack.c.h.b16 %v802
  %v886 = vunpack.c.l.b16 %v803
  %v887 = vunpack.c.h.b16 %v803
  %v888 = vunpack.c.l.b16 %v804
  %v889 = vunpack.c.h.b16 %v804
  %v890 = vunpack.c.l.b16 %v805
  %v891 = vunpack.c.h.b16 %v805
  %v892 = vunpack.c.l.b16 %v806
  %v893 = vunpack.c.h.b16 %v806
  %v894 = vunpack.c.l.b16 %v807
  %v895 = vunpack.c.h.b16 %v807
  %v896 = vunpack.c.l.b16 %v808
  %v897 = vunpack.c.h.b16 %v808
  %v898 = vunpack.c.l.b16 %v809
  %v899 = vunpack.c.h.b16 %v809
  %v900 = vunpack.c.l.b16 %v810
  %v901 = vunpack.c.h.b16 %v810
  %v902 = vunpack.c.l.b16 %v811
  %v903 = vunpack.c.h.b16 %v811
  %v904 = vunpack.c.l.b16 %v812
  %v905 = vunpack.c.h.b16 %v812
  %v906 = vunpack.c.l.b16 %v813
  %v907 = vunpack.c.h.b16 %v813
  %v908 = vunpack.c.l.b16 %v814
  %v909 = vunpack.c.h.b16 %v814
  %v910 = vunpack.c.l.b16 %v815
  %v911 = vunpack.c.h.b16 %v815
  %v912 = vpack.c.b16 %v848, %v848
  %v913 = vpack.c.b16 %v849, %v849
  %v914 = vpack.c.b16 %v850, %v850
  %v915 = vpack.c.b16 %v851, %v851
  %v916 = vpack.c.b16 %v852, %v852
  %v917 = vpack.c.b16 %v853, %v853
  %v918 = vpack.c.b16 %v854, %v854
  %v919 = vpack.c.b16 %v855, %v855
  %v920 = vpack.c.b16 %v856, %v856
  %v921 = vpack.c.b16 %v857, %v857
  %v922 = vpack.c.b16 %v858, %v858
  %v923 = vpack.c.b16 %v859, %v859
  %v924 = vpack.c.b16 %v860, %v860
  %v925 = vpack.c.b16 %v861, %v861
  %v926 = vpack.c.b16 %v862, %v862
  %v927 = vpack.c.b16 %v863, %v863
  %v928 = vpack.c.b16 %v864, %v864
  %v929 = vpack.c.b16 %v865, %v865
  %v930 = vpack.c.b16 %v866, %v866
  %v931 = vpack.c.b16 %v867, %v867
  %v932 = vpack.c.b16 %v868, %v868
  %v933 = vpack.c.b16 %v869, %v869
  %v934 = vpack.c.b16 %v870, %v870
  %v935 = vpack.c.b16 %v871, %v871
  %v936 = vpack.c.b16 %v872, %v872
  %v937 = vpack.c.b16 %v873, %v873
  %v938 = vpack.c.b16 %v874, %v874
  %v939 = vpack.c.b16 %v875, %v875
  %v940 = vpack.c.b16 %v876, %v876
  %v941 = vpack.c.b16 %v877, %v877
  %v942 = vpack.c.b16 %v878, %v878
  %v943 = vpack.c.b16 %v879, %v879
  %v944 = vpack.c.b16 %v880, %v880
  %v945 = vpack.c.b16 %v881, %v881
  %v946 = vpack.c.b16 %v882, %v882
  %v947 = vpack.c.b16 %v883, %v883
  %v948 = vpack.c.b16 %v884, %v884
  %v949 = vpack.c.b16 %v885, %v885
  %v950 = vpack.c.b16 %v886, %v886
  %v951 = vpack.c.b16 %v887, %v887
  %v952 = vpack.c.b16 %v888, %v888
  %v953 = vpack.c.b16 %v889, %v889
  %v954 = vpack.c.b16 %v890, %v890
  %v955 = vpack.c.b16 %v891, %v891
  %v956 = vpack.c.b16 %v892, %v892
  %v957 = vpack.c.b16 %v893, %v893
  %v958 = vpack.c.b16 %v894, %v894
  %v959 = vpack.c.b16 %v895, %v895
  %v960 = vpack.c.b16 %v896, %v896
  %v961 = vpack.c.b16 %v897, %v897
  %v962 = vpack.c.b16 %v898, %v898
  %v963 = vpack.c.b16 %v899, %v899
  %v964 = vpack.c.b16 %v900, %v900
  %v965 = vpack.c.b16 %v901, %v901
  %v966 = vpack.c.b16 %v902, %v902
  %v967 = vpack.c.b16 %v903, %v903
  %v968 = vpack.c.b16 %v904, %v904
  %v969 = vpack.c.b16 %v905, %v905
  %v970 = vpack.c.b16 %v906, %v906
  %v971 = vpack.c.b16 %v907, %v907
  %v972 = vpack.c.b16 %v908, %v908
  %v973 = vpack.c.b16 %v909, %v909
  %v974 = vpack.c.b16 %v910, %v910
  %v975 = vpack.c.b16 %v911, %v911
  %vm1040 = vcmask 60416
  %1041 = vst.msk [vmem:[%s3] sm:$0xf] %vm1040, %v912
  %1042 = vst.msk [vmem:[%s3 + $0x4] sm:$0xf] %vm1040, %v913
  %1043 = vst.msk [vmem:[%s3 + $0x8] sm:$0xf] %vm1040, %v914
  %1044 = vst.msk [vmem:[%s3 + $0xc] sm:$0xf] %vm1040, %v915
  %1045 = vst.msk [vmem:[%s3 + $0x10] sm:$0xf] %vm1040, %v916
  %1046 = vst.msk [vmem:[%s3 + $0x14] sm:$0xf] %vm1040, %v917
  %1047 = vst.msk [vmem:[%s3 + $0x18] sm:$0xf] %vm1040, %v918
  %1048 = vst.msk [vmem:[%s3 + $0x1c] sm:$0xf] %vm1040, %v919
  %1049 = vst.msk [vmem:[%s3 + $0x20] sm:$0xf] %vm1040, %v920
  %1050 = vst.msk [vmem:[%s3 + $0x24] sm:$0xf] %vm1040, %v921
  %1051 = vst.msk [vmem:[%s3 + $0x28] sm:$0xf] %vm1040, %v922
  %1052 = vst.msk [vmem:[%s3 + $0x2c] sm:$0xf] %vm1040, %v923
  %1053 = vst.msk [vmem:[%s3 + $0x30] sm:$0xf] %vm1040, %v924
  %1054 = vst.msk [vmem:[%s3 + $0x34] sm:$0xf] %vm1040, %v925
  %1055 = vst.msk [vmem:[%s3 + $0x38] sm:$0xf] %vm1040, %v926
  %1056 = vst.msk [vmem:[%s3 + $0x3c] sm:$0xf] %vm1040, %v927
  %1057 = vst.msk [vmem:[%s3 + $0x40] sm:$0xf] %vm1040, %v928
  %1058 = vst.msk [vmem:[%s3 + $0x44] sm:$0xf] %vm1040, %v929
  %1059 = vst.msk [vmem:[%s3 + $0x48] sm:$0xf] %vm1040, %v930
  %1060 = vst.msk [vmem:[%s3 + $0x4c] sm:$0xf] %vm1040, %v931
  %1061 = vst.msk [vmem:[%s3 + $0x50] sm:$0xf] %vm1040, %v932
  %1062 = vst.msk [vmem:[%s3 + $0x54] sm:$0xf] %vm1040, %v933
  %1063 = vst.msk [vmem:[%s3 + $0x58] sm:$0xf] %vm1040, %v934
  %1064 = vst.msk [vmem:[%s3 + $0x5c] sm:$0xf] %vm1040, %v935
  %1065 = vst.msk [vmem:[%s3 + $0x60] sm:$0xf] %vm1040, %v936
  %1066 = vst.msk [vmem:[%s3 + $0x64] sm:$0xf] %vm1040, %v937
  %1067 = vst.msk [vmem:[%s3 + $0x68] sm:$0xf] %vm1040, %v938
  %1068 = vst.msk [vmem:[%s3 + $0x6c] sm:$0xf] %vm1040, %v939
  %1069 = vst.msk [vmem:[%s3 + $0x70] sm:$0xf] %vm1040, %v940
  %1070 = vst.msk [vmem:[%s3 + $0x74] sm:$0xf] %vm1040, %v941
  %1071 = vst.msk [vmem:[%s3 + $0x78] sm:$0xf] %vm1040, %v942
  %1072 = vst.msk [vmem:[%s3 + $0x7c] sm:$0xf] %vm1040, %v943
  %1073 = vst.msk [vmem:[%s3 + $0x80] sm:$0xf] %vm1040, %v944
  %1074 = vst.msk [vmem:[%s3 + $0x84] sm:$0xf] %vm1040, %v945
  %1075 = vst.msk [vmem:[%s3 + $0x88] sm:$0xf] %vm1040, %v946
  %1076 = vst.msk [vmem:[%s3 + $0x8c] sm:$0xf] %vm1040, %v947
  %1077 = vst.msk [vmem:[%s3 + $0x90] sm:$0xf] %vm1040, %v948
  %1078 = vst.msk [vmem:[%s3 + $0x94] sm:$0xf] %vm1040, %v949
  %1079 = vst.msk [vmem:[%s3 + $0x98] sm:$0xf] %vm1040, %v950
  %1080 = vst.msk [vmem:[%s3 + $0x9c] sm:$0xf] %vm1040, %v951
  %1081 = vst.msk [vmem:[%s3 + $0xa0] sm:$0xf] %vm1040, %v952
  %1082 = vst.msk [vmem:[%s3 + $0xa4] sm:$0xf] %vm1040, %v953
  %1083 = vst.msk [vmem:[%s3 + $0xa8] sm:$0xf] %vm1040, %v954
  %1084 = vst.msk [vmem:[%s3 + $0xac] sm:$0xf] %vm1040, %v955
  %1085 = vst.msk [vmem:[%s3 + $0xb0] sm:$0xf] %vm1040, %v956
  %1086 = vst.msk [vmem:[%s3 + $0xb4] sm:$0xf] %vm1040, %v957
  %1087 = vst.msk [vmem:[%s3 + $0xb8] sm:$0xf] %vm1040, %v958
  %1088 = vst.msk [vmem:[%s3 + $0xbc] sm:$0xf] %vm1040, %v959
  %1089 = vst.msk [vmem:[%s3 + $0xc0] sm:$0xf] %vm1040, %v960
  %1090 = vst.msk [vmem:[%s3 + $0xc4] sm:$0xf] %vm1040, %v961
  %1091 = vst.msk [vmem:[%s3 + $0xc8] sm:$0xf] %vm1040, %v962
  %1092 = vst.msk [vmem:[%s3 + $0xcc] sm:$0xf] %vm1040, %v963
  %1093 = vst.msk [vmem:[%s3 + $0xd0] sm:$0xf] %vm1040, %v964
  %1094 = vst.msk [vmem:[%s3 + $0xd4] sm:$0xf] %vm1040, %v965
  %1095 = vst.msk [vmem:[%s3 + $0xd8] sm:$0xf] %vm1040, %v966
  %1096 = vst.msk [vmem:[%s3 + $0xdc] sm:$0xf] %vm1040, %v967
  %1097 = vst.msk [vmem:[%s3 + $0xe0] sm:$0xf] %vm1040, %v968
  %1098 = vst.msk [vmem:[%s3 + $0xe4] sm:$0xf] %vm1040, %v969
  %1099 = vst.msk [vmem:[%s3 + $0xe8] sm:$0xf] %vm1040, %v970
  %1100 = vst.msk [vmem:[%s3 + $0xec] sm:$0xf] %vm1040, %v971
  %1101 = vst.msk [vmem:[%s3 + $0xf0] sm:$0xf] %vm1040, %v972
  %1102 = vst.msk [vmem:[%s3 + $0xf4] sm:$0xf] %vm1040, %v973
  %1103 = vst.msk [vmem:[%s3 + $0xf8] sm:$0xf] %vm1040, %v974
  %1104 = vst.msk [vmem:[%s3 + $0xfc] sm:$0xf] %vm1040, %v975
  // Predicated region
  $region14: #{_lambda_.1} parent=0 // pred_check
    _
  $region15: #{_lambda_.1} parent=0 // pred_check_branch
    %1106 = sbr.rel (0) target = $region17
  $region16: #{_lambda_.1} parent=0 // pred_region
    _
  $region17: #{_lambda_.1} parent=0 // pred_fallthru
    _
  // Predicated region
  $region18: #{_lambda_.1} parent=0 // pred_check
    _
  $region19: #{_lambda_.1} parent=0 // pred_check_branch
    %1108 = sbr.rel (0) target = $region21
  $region20: #{_lambda_.1} parent=0 // pred_region
    _
  $region21: #{_lambda_.1} parent=0 // pred_fallthru
    _

</llo_original>
